<compile_context>
chip_gen: v5e
topology: v5e:2x2
jax: 0.10.0
libtpu: 0.0.40
codegen_flags: <defaults>
</compile_context>

<pallas_src>
import functools
import math

import jax
import jax.numpy as jnp
from jax.experimental import pallas as pl
from jax.experimental.pallas import tpu as pltpu


# ---------------------------------------------------------------------------
# Kernel 1: sparsity measure  M = max_k(Q K^T) - mean_k(Q K^T)  for all heads
#           of one batch element.  Output row per head is lane-dense (1, L_Q).
# ---------------------------------------------------------------------------
def _m_kernel(q_ref, k_ref, m_ref, *, n_heads, head_dim):
    rows = []
    for h in range(n_heads):                      # static unroll over heads
        sl = slice(h * head_dim, (h + 1) * head_dim)
        q_h = q_ref[:, sl].astype(jnp.bfloat16)   # (L_Q, D)
        k_h = k_ref[:, sl].astype(jnp.bfloat16)   # (L_K, D)
        # Scores laid out (L_K, L_Q): reduce over sublanes, emit lane-dense row.
        s = jax.lax.dot_general(
            k_h, q_h, (((1,), (1,)), ((), ())),
            preferred_element_type=jnp.float32)   # (L_K, L_Q) f32
        l_k = s.shape[0]
        m_h = (jnp.max(s, axis=0, keepdims=True)
               - jnp.sum(s, axis=0, keepdims=True) * (1.0 / l_k))  # (1, L_Q)
        rows.append(m_h)
    m_ref[...] = jnp.concatenate(rows, axis=0)    # (H, L_Q) single dense store


# ---------------------------------------------------------------------------
# Kernel 2: fused context for one batch element (all heads):
#   context = broadcast(mean(V));  context[index] = softmax(Q[index] K^T * s) V
# Gather / scatter of the top-u queries are exact one-hot matmuls.
# ---------------------------------------------------------------------------
def _context_kernel(idx_ref, idxt_ref, q_ref, k_ref, v_ref, out_ref, *,
                    n_heads, head_dim, scale):
    l_q = q_ref.shape[0]
    u = idx_ref.shape[1]
    heads = []
    for h in range(n_heads):                      # static unroll over heads
        sl = slice(h * head_dim, (h + 1) * head_dim)
        q_h = q_ref[:, sl].astype(jnp.bfloat16)   # (L_Q, D)
        k_h = k_ref[:, sl].astype(jnp.bfloat16)   # (L_K, D)
        v_h = v_ref[:, sl]                        # (L_K, D) f32

        idx_row = idx_ref[h:h + 1, :]             # (1, u) int32
        idx_col = idxt_ref[:, h:h + 1]            # (u, 1) int32

        # One-hot selection matrices (exact 0/1 values).
        oh_ul = (jax.lax.broadcasted_iota(jnp.int32, (u, l_q), 1)
                 == idx_col).astype(jnp.bfloat16)         # (u, L_Q) gather
        oh_lu = (jax.lax.broadcasted_iota(jnp.int32, (l_q, u), 0)
                 == idx_row).astype(jnp.float32)          # (L_Q, u) scatter

        # Gather top-u queries (exact: one-hot * bf16 rows).
        q_red = jnp.dot(oh_ul, q_h,
                        preferred_element_type=jnp.float32
                        ).astype(jnp.bfloat16)            # (u, D)

        # Reduced attention scores + softmax (f32 math, EUP reciprocal).
        s = jax.lax.dot_general(
            q_red, k_h, (((1,), (1,)), ((), ())),
            preferred_element_type=jnp.float32) * scale   # (u, L_K)
        s_max = jnp.max(s, axis=-1, keepdims=True)
        p = jnp.exp(s - s_max)
        denom = jnp.sum(p, axis=-1, keepdims=True)
        attn = p * pl.reciprocal(denom, approx=True)      # (u, L_K)

        attn_out = jnp.dot(attn.astype(jnp.bfloat16), v_h.astype(jnp.bfloat16),
                           preferred_element_type=jnp.float32)   # (u, D)

        # Initial context = mean(V); overwrite the selected rows (scatter).
        v_mean = jnp.mean(v_h.astype(jnp.float32), axis=0, keepdims=True)
        scattered = jnp.dot(oh_lu, attn_out,
                            preferred_element_type=jnp.float32)  # (L_Q, D)
        hit = jnp.sum(oh_lu, axis=1, keepdims=True)              # (L_Q, 1)
        ctx_h = jnp.where(hit > 0.5, scattered,
                          jnp.broadcast_to(v_mean, (l_q, head_dim)))
        heads.append(ctx_h)

    # Single lane-dense (L_Q, H*D) store in the final output layout.
    out_ref[...] = jnp.concatenate(heads, axis=1).astype(out_ref.dtype)


# ---------------------------------------------------------------------------
# Wrapper: full ProbAttention forward (useSample_k == False branch)
# ---------------------------------------------------------------------------
def prob_attention(queries, keys, values, factor):
    """queries/keys/values: (B, L, H, D) float32 -> (B, L_Q, H*D) float32."""
    B, L_Q, H, D = queries.shape
    _, L_K, _, _ = keys.shape
    HD = H * D

    u = int(factor * math.ceil(math.log(L_Q)))
    u = min(max(u, 1), L_Q)

    # Free, contiguous reshapes only -- no HBM transpose passes.
    q2 = queries.reshape(B, L_Q, HD)
    k2 = keys.reshape(B, L_K, HD)
    v2 = values.reshape(B, L_K, HD)

    # --- kernel 1: sparsity measure M (lane-dense (B, H, L_Q)) -------------
    m = pl.pallas_call(
        functools.partial(_m_kernel, n_heads=H, head_dim=D),
        out_shape=jax.ShapeDtypeStruct((B, H, L_Q), jnp.float32),
        grid=(B,),
        in_specs=[
            pl.BlockSpec((None, L_Q, HD), lambda b: (b, 0, 0)),
            pl.BlockSpec((None, L_K, HD), lambda b: (b, 0, 0)),
        ],
        out_specs=pl.BlockSpec((None, H, L_Q), lambda b: (b, 0, 0)),
        compiler_params=pltpu.CompilerParams(
            dimension_semantics=("parallel",)),
    )(q2, k2)

    # top-u query selection (tiny op, kept in plain JAX like torch.topk glue)
    _, index = jax.lax.top_k(m, u)                       # (B, H, u) int32
    index = index.astype(jnp.int32)
    index_t = jnp.swapaxes(index, 1, 2)                  # (B, u, H) (tiny)

    scale = 1.0 / math.sqrt(D)

    # --- kernel 2: fused gather + softmax-attention + mean(V) + scatter ----
    context = pl.pallas_call(
        functools.partial(_context_kernel, n_heads=H, head_dim=D, scale=scale),
        out_shape=jax.ShapeDtypeStruct((B, L_Q, HD), queries.dtype),
        grid=(B,),
        in_specs=[
            pl.BlockSpec((None, H, u), lambda b: (b, 0, 0)),
            pl.BlockSpec((None, u, H), lambda b: (b, 0, 0)),
            pl.BlockSpec((None, L_Q, HD), lambda b: (b, 0, 0)),
            pl.BlockSpec((None, L_K, HD), lambda b: (b, 0, 0)),
            pl.BlockSpec((None, L_K, HD), lambda b: (b, 0, 0)),
        ],
        out_specs=pl.BlockSpec((None, L_Q, HD), lambda b: (b, 0, 0)),
        compiler_params=pltpu.CompilerParams(
            dimension_semantics=("parallel",)),
    )(index, index_t, q2, k2, v2)

    return context                                        # (B, L_Q, H*D)


if __name__ == "__main__":
    B, L, H, D = 2, 16, 4, 32
    factor = 2

    key = jax.random.PRNGKey(0)
    kq, kk, kv = jax.random.split(key, 3)
    queries = jax.random.normal(kq, (B, L, H, D), dtype=jnp.float32)
    keys = jax.random.normal(kk, (B, L, H, D), dtype=jnp.float32)
    values = jax.random.normal(kv, (B, L, H, D), dtype=jnp.float32)

    out = prob_attention(queries, keys, values, factor)
    out = jax.block_until_ready(out)
    assert out.shape == (B, L, H * D)
    assert bool(jnp.isfinite(out).all())
    print("KERNEL_OK")
</pallas_src>

<mosaic_0001>
module attributes {stable_mosaic.version = 11 : i64} {
  func.func @_m_kernel(%arg0: i32, %arg1: memref<1x16x128xf32, #tpu.memory_space<vmem>>, %arg2: memref<1x16x128xf32, #tpu.memory_space<vmem>>, %arg3: memref<1x4x16xf32, #tpu.memory_space<vmem>>) attributes {dimension_semantics = [#tpu.dimension_semantics<parallel>], iteration_bounds = array<i64: 2>, scalar_prefetch = 0 : i64, scratch_operands = 0 : i64, tpu.core_type = #tpu.core_type<tc>, window_params = [{transform_indices = @transform_0, window_bounds = array<i64: 1, 16, 128>}, {transform_indices = @transform_1, window_bounds = array<i64: 1, 16, 128>}, {transform_indices = @transform_2, window_bounds = array<i64: 1, 4, 16>}]} {
    %c0 = arith.constant 0 : index
    %c0_0 = arith.constant 0 : index
    %c0_1 = arith.constant 0 : index
    %0 = vector.load %arg1[%c0, %c0_0, %c0_1] : memref<1x16x128xf32, #tpu.memory_space<vmem>>, vector<1x16x32xf32>
    %1 = vector.shape_cast %0 : vector<1x16x32xf32> to vector<16x32xf32>
    %2 = arith.truncf %1 : vector<16x32xf32> to vector<16x32xbf16>
    %c0_2 = arith.constant 0 : index
    %c0_3 = arith.constant 0 : index
    %c0_4 = arith.constant 0 : index
    %3 = vector.load %arg2[%c0_2, %c0_3, %c0_4] : memref<1x16x128xf32, #tpu.memory_space<vmem>>, vector<1x16x32xf32>
    %4 = vector.shape_cast %3 : vector<1x16x32xf32> to vector<16x32xf32>
    %5 = arith.truncf %4 : vector<16x32xf32> to vector<16x32xbf16>
    %cst = arith.constant dense<0.000000e+00> : vector<16x16xf32>
    %6 = tpu.matmul %5, %2, %cst {dimension_numbers = #tpu.dot_dimension_numbers<[1], [1], [0], [0], [0, 0, 1, 0], [], []>} : vector<16x32xbf16>, vector<16x32xbf16>, vector<16x16xf32> -> vector<16x16xf32>
    %cst_5 = arith.constant dense<0xFF800000> : vector<16xf32>
    %7 = vector.multi_reduction <maximumf>, %6, %cst_5 [0] : vector<16x16xf32> to vector<16xf32>
    %8 = vector.shape_cast %7 : vector<16xf32> to vector<1x16xf32>
    %cst_6 = arith.constant dense<0.000000e+00> : vector<16xf32>
    %9 = vector.multi_reduction <add>, %6, %cst_6 [0] : vector<16x16xf32> to vector<16xf32>
    %10 = vector.shape_cast %9 : vector<16xf32> to vector<1x16xf32>
    %cst_7 = arith.constant 6.250000e-02 : f32
    %11 = vector.broadcast %cst_7 : f32 to vector<1x16xf32>
    %12 = arith.mulf %10, %11 : vector<1x16xf32>
    %13 = arith.subf %8, %12 : vector<1x16xf32>
    %c0_8 = arith.constant 0 : index
    %c0_9 = arith.constant 0 : index
    %c32 = arith.constant 32 : index
    %14 = vector.load %arg1[%c0_8, %c0_9, %c32] : memref<1x16x128xf32, #tpu.memory_space<vmem>>, vector<1x16x32xf32>
    %15 = vector.shape_cast %14 : vector<1x16x32xf32> to vector<16x32xf32>
    %16 = arith.truncf %15 : vector<16x32xf32> to vector<16x32xbf16>
    %c0_10 = arith.constant 0 : index
    %c0_11 = arith.constant 0 : index
    %c32_12 = arith.constant 32 : index
    %17 = vector.load %arg2[%c0_10, %c0_11, %c32_12] : memref<1x16x128xf32, #tpu.memory_space<vmem>>, vector<1x16x32xf32>
    %18 = vector.shape_cast %17 : vector<1x16x32xf32> to vector<16x32xf32>
    %19 = arith.truncf %18 : vector<16x32xf32> to vector<16x32xbf16>
    %cst_13 = arith.constant dense<0.000000e+00> : vector<16x16xf32>
    %20 = tpu.matmul %19, %16, %cst_13 {dimension_numbers = #tpu.dot_dimension_numbers<[1], [1], [0], [0], [0, 0, 1, 0], [], []>} : vector<16x32xbf16>, vector<16x32xbf16>, vector<16x16xf32> -> vector<16x16xf32>
    %cst_14 = arith.constant dense<0xFF800000> : vector<16xf32>
    %21 = vector.multi_reduction <maximumf>, %20, %cst_14 [0] : vector<16x16xf32> to vector<16xf32>
    %22 = vector.shape_cast %21 : vector<16xf32> to vector<1x16xf32>
    %cst_15 = arith.constant dense<0.000000e+00> : vector<16xf32>
    %23 = vector.multi_reduction <add>, %20, %cst_15 [0] : vector<16x16xf32> to vector<16xf32>
    %24 = vector.shape_cast %23 : vector<16xf32> to vector<1x16xf32>
    %cst_16 = arith.constant 6.250000e-02 : f32
    %25 = vector.broadcast %cst_16 : f32 to vector<1x16xf32>
    %26 = arith.mulf %24, %25 : vector<1x16xf32>
    %27 = arith.subf %22, %26 : vector<1x16xf32>
    %c0_17 = arith.constant 0 : index
    %c0_18 = arith.constant 0 : index
    %c64 = arith.constant 64 : index
    %28 = vector.load %arg1[%c0_17, %c0_18, %c64] : memref<1x16x128xf32, #tpu.memory_space<vmem>>, vector<1x16x32xf32>
    %29 = vector.shape_cast %28 : vector<1x16x32xf32> to vector<16x32xf32>
    %30 = arith.truncf %29 : vector<16x32xf32> to vector<16x32xbf16>
    %c0_19 = arith.constant 0 : index
    %c0_20 = arith.constant 0 : index
    %c64_21 = arith.constant 64 : index
    %31 = vector.load %arg2[%c0_19, %c0_20, %c64_21] : memref<1x16x128xf32, #tpu.memory_space<vmem>>, vector<1x16x32xf32>
    %32 = vector.shape_cast %31 : vector<1x16x32xf32> to vector<16x32xf32>
    %33 = arith.truncf %32 : vector<16x32xf32> to vector<16x32xbf16>
    %cst_22 = arith.constant dense<0.000000e+00> : vector<16x16xf32>
    %34 = tpu.matmul %33, %30, %cst_22 {dimension_numbers = #tpu.dot_dimension_numbers<[1], [1], [0], [0], [0, 0, 1, 0], [], []>} : vector<16x32xbf16>, vector<16x32xbf16>, vector<16x16xf32> -> vector<16x16xf32>
    %cst_23 = arith.constant dense<0xFF800000> : vector<16xf32>
    %35 = vector.multi_reduction <maximumf>, %34, %cst_23 [0] : vector<16x16xf32> to vector<16xf32>
    %36 = vector.shape_cast %35 : vector<16xf32> to vector<1x16xf32>
    %cst_24 = arith.constant dense<0.000000e+00> : vector<16xf32>
    %37 = vector.multi_reduction <add>, %34, %cst_24 [0] : vector<16x16xf32> to vector<16xf32>
    %38 = vector.shape_cast %37 : vector<16xf32> to vector<1x16xf32>
    %cst_25 = arith.constant 6.250000e-02 : f32
    %39 = vector.broadcast %cst_25 : f32 to vector<1x16xf32>
    %40 = arith.mulf %38, %39 : vector<1x16xf32>
    %41 = arith.subf %36, %40 : vector<1x16xf32>
    %c0_26 = arith.constant 0 : index
    %c0_27 = arith.constant 0 : index
    %c96 = arith.constant 96 : index
    %42 = vector.load %arg1[%c0_26, %c0_27, %c96] : memref<1x16x128xf32, #tpu.memory_space<vmem>>, vector<1x16x32xf32>
    %43 = vector.shape_cast %42 : vector<1x16x32xf32> to vector<16x32xf32>
    %44 = arith.truncf %43 : vector<16x32xf32> to vector<16x32xbf16>
    %c0_28 = arith.constant 0 : index
    %c0_29 = arith.constant 0 : index
    %c96_30 = arith.constant 96 : index
    %45 = vector.load %arg2[%c0_28, %c0_29, %c96_30] : memref<1x16x128xf32, #tpu.memory_space<vmem>>, vector<1x16x32xf32>
    %46 = vector.shape_cast %45 : vector<1x16x32xf32> to vector<16x32xf32>
    %47 = arith.truncf %46 : vector<16x32xf32> to vector<16x32xbf16>
    %cst_31 = arith.constant dense<0.000000e+00> : vector<16x16xf32>
    %48 = tpu.matmul %47, %44, %cst_31 {dimension_numbers = #tpu.dot_dimension_numbers<[1], [1], [0], [0], [0, 0, 1, 0], [], []>} : vector<16x32xbf16>, vector<16x32xbf16>, vector<16x16xf32> -> vector<16x16xf32>
    %cst_32 = arith.constant dense<0xFF800000> : vector<16xf32>
    %49 = vector.multi_reduction <maximumf>, %48, %cst_32 [0] : vector<16x16xf32> to vector<16xf32>
    %50 = vector.shape_cast %49 : vector<16xf32> to vector<1x16xf32>
    %cst_33 = arith.constant dense<0.000000e+00> : vector<16xf32>
    %51 = vector.multi_reduction <add>, %48, %cst_33 [0] : vector<16x16xf32> to vector<16xf32>
    %52 = vector.shape_cast %51 : vector<16xf32> to vector<1x16xf32>
    %cst_34 = arith.constant 6.250000e-02 : f32
    %53 = vector.broadcast %cst_34 : f32 to vector<1x16xf32>
    %54 = arith.mulf %52, %53 : vector<1x16xf32>
    %55 = arith.subf %50, %54 : vector<1x16xf32>
    %56 = tpu.concatenate %13, %27, %41, %55 in 0 : vector<1x16xf32>, vector<1x16xf32>, vector<1x16xf32>, vector<1x16xf32> -> vector<4x16xf32>
    %c0_35 = arith.constant 0 : index
    %c0_36 = arith.constant 0 : index
    %c0_37 = arith.constant 0 : index
    %57 = vector.load %arg3[%c0_35, %c0_36, %c0_37] : memref<1x4x16xf32, #tpu.memory_space<vmem>>, vector<1x4x16xf32>
    %58 = vector.shape_cast %57 : vector<1x4x16xf32> to vector<4x16xf32>
    %59 = vector.shape_cast %56 : vector<4x16xf32> to vector<1x4x16xf32>
    tpu.vector_store %arg3[%c0_35, %c0_36, %c0_37], %59 {strides = array<i32>} : memref<1x4x16xf32, #tpu.memory_space<vmem>>, vector<1x4x16xf32>,
    return
  }
  func.func @transform_0(%arg0: i32) -> (i32, i32, i32) {
    %c0_i32 = arith.constant 0 : i32
    %c0_i32_0 = arith.constant 0 : i32
    %c0_i32_1 = arith.constant 0 : i32
    return %arg0, %c0_i32, %c0_i32_0 : i32, i32, i32
  }
  func.func @transform_1(%arg0: i32) -> (i32, i32, i32) {
    %c0_i32 = arith.constant 0 : i32
    %c0_i32_0 = arith.constant 0 : i32
    %c0_i32_1 = arith.constant 0 : i32
    return %arg0, %c0_i32, %c0_i32_0 : i32, i32, i32
  }
  func.func @transform_2(%arg0: i32) -> (i32, i32, i32) {
    %c0_i32 = arith.constant 0 : i32
    %c0_i32_0 = arith.constant 0 : i32
    %c0_i32_1 = arith.constant 0 : i32
    return %arg0, %c0_i32, %c0_i32_0 : i32, i32, i32
  }
}

</mosaic_0001>

<llo_original>
// kernel: tpu_custom_call.1
$region0: #{tpu_custom_call.1}
  #allocation0 [shape = 'u32[]', space=smem, size = 0x4, offset = 0x4, fixed_abs, tag = 'smem constant byte address 0x4 - core index']
  #allocation1 [shape = 'u32[72,128]{1,0:T(1,128)}', space=vmem, size = 0x9000, scoped, tag = 'internal scratch']
  %s0 = inlined_call_operand.hbm [shape: f32[2,16,128], index: 0, kind: input, shape index: {}]
  %s1 = inlined_call_operand.hbm [shape: f32[2,16,128], index: 1, kind: input, shape index: {}]
  %s2 = inlined_call_operand.hbm [shape: f32[2,4,16], index: 2, kind: output, shape index: {}]
  %s3 = sld [smem:[#allocation0]]
  $region49: #{tpu_custom_call.1} parent=0
    _
  %s5 = ssub.s32 1, %s3
  %s6 = scalar_select 0, %s5, %s3
  $region1: #{tpu_custom_call.1} parent=0
    #allocation2 [shape = 'u8[16384]{0}', space=vmem, size = 0x4000, scoped, tag = 'input window, operand 0']
    #allocation3 [shape = 's32[2]{0}', space=sflag, size = 0x8, scoped, tag = 'scoped memory for tpu_custom_call.1']
    #allocation4 [shape = 's32[2]{0}', space=sflag, size = 0x8, scoped, tag = 'scoped memory for tpu_custom_call.1']
    #allocation5 [shape = 'u8[16384]{0}', space=vmem, size = 0x4000, scoped, tag = 'input window, operand 1']
    #allocation6 [shape = 's32[2]{0}', space=sflag, size = 0x8, scoped, tag = 'scoped memory for tpu_custom_call.1']
    #allocation7 [shape = 'u8[4096]{0}', space=vmem, size = 0x1000, scoped, tag = 'output window, operand 0']
    %7 = vsyncpa [#allocation3], 0
    %s8 = scalar_lea.sflag [#allocation3], 1
    %9 = vsyncpa %s8, 0
    %10 = vsyncpa [#allocation6], 0
    %s11 = scalar_lea.sflag [#allocation6], 1
    %12 = vsyncpa %s11, 0
    %13 = vsyncpa [#allocation4], 0
    %s14 = scalar_lea.sflag [#allocation4], 1
    %15 = vsyncpa %s14, 0
    loop: start=0, step=1, limit=4
    $region2: #{tpu_custom_call.1} parent=1 // loop_pre_header
      _
    $region3: #{tpu_custom_call.1} parent=1 // loop_header
      %s17 = sphi 0, %s21
      %p18 = scmp.ge.s32.totalorder %s17, 4
      %s27 = sphi 0, %s29
      %s30 = sphi 0, %s27
      %s31 = sphi 0, %s30
      %s47 = sphi 0, %s31
      %s53 = sphi 0, %s55
      %s56 = sphi 0, %s53
      %s57 = sphi 0, %s56
      %s73 = sphi 0, %s57
      %s79 = sphi 0, %s81
      %s82 = sphi 0, %s79
      %s83 = sphi 0, %s82
      %s99 = sphi 0, %s83
    $region4: #{tpu_custom_call.1} parent=1 // loop_header_branch
      %20 = sbr.rel (%p18) target = $region8
    $region5: #{tpu_custom_call.1} parent=1 // loop_body
      %s22 = ssub.s32 %s17, 1
      %s23 = ssub.s32 %s17, 2
      %s24 = sadd.s32 %s17, 1
      %s25 = ssub.s32 %s17, %s24
      %p26 = scmp.eq.s32.totalorder %s25, 0
      %s28 = sadd.s32 %s27, 1
      %s29 = scalar_select %p26, %s27, %s28
      %p32 = pneg %p26
      %p33 = scmp.eq.s32.totalorder %s17, 1
      %p34 = por %p32, %p33
      %p35 = scmp.ne.s32.totalorder %s27, %s30
      %p36 = scmp.eq.s32.totalorder %s17, 0
      %p37 = por %p35, %p36
      %p38 = scmp.ne.s32.totalorder %s27, %s30
      %p39 = scmp.eq.s32.totalorder %s22, 1
      %p40 = por %p38, %p39
      %p41 = scmp.ne.s32.totalorder %s30, %s31
      %p42 = scmp.eq.s32.totalorder %s22, 0
      %p43 = por %p41, %p42
      %p44 = scmp.ne.s32.totalorder %s30, %s31
      %p45 = scmp.eq.s32.totalorder %s23, 1
      %p46 = por %p44, %p45
      %p48 = scmp.ne.s32.totalorder %s31, %s47
      %p49 = scmp.eq.s32.totalorder %s23, 0
      %p50 = por %p48, %p49
      %s51 = ssub.s32 %s17, %s24
      %p52 = scmp.eq.s32.totalorder %s51, 0
      %s54 = sadd.s32 %s53, 1
      %s55 = scalar_select %p52, %s53, %s54
      %p58 = pneg %p52
      %p59 = scmp.eq.s32.totalorder %s17, 1
      %p60 = por %p58, %p59
      %p61 = scmp.ne.s32.totalorder %s53, %s56
      %p62 = scmp.eq.s32.totalorder %s17, 0
      %p63 = por %p61, %p62
      %p64 = scmp.ne.s32.totalorder %s53, %s56
      %p65 = scmp.eq.s32.totalorder %s22, 1
      %p66 = por %p64, %p65
      %p67 = scmp.ne.s32.totalorder %s56, %s57
      %p68 = scmp.eq.s32.totalorder %s22, 0
      %p69 = por %p67, %p68
      %p70 = scmp.ne.s32.totalorder %s56, %s57
      %p71 = scmp.eq.s32.totalorder %s23, 1
      %p72 = por %p70, %p71
      %p74 = scmp.ne.s32.totalorder %s57, %s73
      %p75 = scmp.eq.s32.totalorder %s23, 0
      %p76 = por %p74, %p75
      %s77 = ssub.s32 %s17, %s24
      %p78 = scmp.eq.s32.totalorder %s77, 0
      %s80 = sadd.s32 %s79, 1
      %s81 = scalar_select %p78, %s79, %s80
      %p84 = pneg %p78
      %p85 = scmp.eq.s32.totalorder %s17, 1
      %p86 = por %p84, %p85
      %p87 = scmp.ne.s32.totalorder %s79, %s82
      %p88 = scmp.eq.s32.totalorder %s17, 0
      %p89 = por %p87, %p88
      %p90 = scmp.ne.s32.totalorder %s79, %s82
      %p91 = scmp.eq.s32.totalorder %s22, 1
      %p92 = por %p90, %p91
      %p93 = scmp.ne.s32.totalorder %s82, %s83
      %p94 = scmp.eq.s32.totalorder %s22, 0
      %p95 = por %p93, %p94
      %p96 = scmp.ne.s32.totalorder %s82, %s83
      %p97 = scmp.eq.s32.totalorder %s23, 1
      %p98 = por %p96, %p97
      %p100 = scmp.ne.s32.totalorder %s83, %s99
      %p101 = scmp.eq.s32.totalorder %s23, 0
      %p102 = por %p100, %p101
      %p103 = scmp.le.s32.totalorder 1, %s17
      %p104 = scmp.lt.s32.totalorder %s17, 3
      %p105 = pnand %p103, %p104
      %p106 = pneg %p105
      // Predicated region
      $region9: #{tpu_custom_call.1} parent=5 // pred_check
        _
      $region10: #{tpu_custom_call.1} parent=5 // pred_check_branch
        %108 = sbr.rel (%p105) target = $region12
      $region11: #{tpu_custom_call.1} parent=5 // pred_region
        %s109 = ssub.s32 %s17, 1
      $region12: #{tpu_custom_call.1} parent=5 // pred_fallthru
        _
      %p110 = scmp.lt.s32.totalorder %s17, 2
      // Predicated region
      $region13: #{tpu_custom_call.1} parent=5 // pred_check
        %p111 = pneg %p110
      $region14: #{tpu_custom_call.1} parent=5 // pred_check_branch
        %113 = sbr.rel (%p111) target = $region16
      $region15: #{tpu_custom_call.1} parent=5 // pred_region
        // Predicated region
        $region17: #{tpu_custom_call.1} parent=15 // pred_check
          %p114 = pneg %p37
        $region18: #{tpu_custom_call.1} parent=15 // pred_check_branch
          %116 = sbr.rel (%p114) target = $region20
        $region19: #{tpu_custom_call.1} parent=15 // pred_region
          %s117 = sand.u32 %s27, 1
          %s118 = scalar_lea.sflag [#allocation3], %s117
          %s119 = sand.u32 %s27, 1
          %s120 = smul.addr %s119, 16
          %s121 = scalar_lea.vmem [#allocation2], %s120
          %123 = vsyncadd %s118, 0
          %s124 = smul.addr %s17, 2
          %s125 = smul.addr %s124, 8
          %s126 = scalar_lea.hbm %s0, %s125
          %s127 = sshll.u32 %s126, 4
          %s128 = int_to_ptr.hbm [resolvable:$true] %s127
          %s129 = sshll.u32 %s121, 4
          %s130 = int_to_ptr.vmem [resolvable:$true] %s129
          %135 = dma.hbm_to_vmem [thread:$0]  %s128, 256, %s130, %s118, 128, 128, 8
        $region20: #{tpu_custom_call.1} parent=15 // pred_fallthru
          _
        // Predicated region
        $region21: #{tpu_custom_call.1} parent=15 // pred_check
          %p136 = pneg %p63
        $region22: #{tpu_custom_call.1} parent=15 // pred_check_branch
          %138 = sbr.rel (%p136) target = $region24
        $region23: #{tpu_custom_call.1} parent=15 // pred_region
          %s139 = sand.u32 %s53, 1
          %s140 = scalar_lea.sflag [#allocation6], %s139
          %s141 = sand.u32 %s53, 1
          %s142 = smul.addr %s141, 16
          %s143 = scalar_lea.vmem [#allocation5], %s142
          %145 = vsyncadd %s140, 0
          %s146 = smul.addr %s17, 2
          %s147 = smul.addr %s146, 8
          %s148 = scalar_lea.hbm %s1, %s147
          %s149 = sshll.u32 %s148, 4
          %s150 = int_to_ptr.hbm [resolvable:$true] %s149
          %s151 = sshll.u32 %s143, 4
          %s152 = int_to_ptr.vmem [resolvable:$true] %s151
          %157 = dma.hbm_to_vmem [thread:$0]  %s150, 256, %s152, %s140, 128, 128, 8
        $region24: #{tpu_custom_call.1} parent=15 // pred_fallthru
          _
      $region16: #{tpu_custom_call.1} parent=5 // pred_fallthru
        _
      %p158 = scmp.le.s32.totalorder 1, %s17
      %p159 = scmp.lt.s32.totalorder %s17, 3
      %p160 = pnand %p158, %p159
      %p161 = pneg %p160
      // Predicated region
      $region25: #{tpu_custom_call.1} parent=5 // pred_check
        _
      $region26: #{tpu_custom_call.1} parent=5 // pred_check_branch
        %163 = sbr.rel (%p160) target = $region28
      $region27: #{tpu_custom_call.1} parent=5 // pred_region
        %s164 = ssub.s32 %s17, 1
        %s165 = sand.u32 %s30, 1
        %s166 = scalar_lea.sflag [#allocation3], %s165
        %s167 = sand.u32 %s30, 1
        %s168 = smul.addr %s167, 16
        %s169 = scalar_lea.vmem [#allocation2], %s168
        // Predicated region
        $region29: #{tpu_custom_call.1} parent=27 // pred_check
          %p170 = pneg %p43
        $region30: #{tpu_custom_call.1} parent=27 // pred_check_branch
          %172 = sbr.rel (%p170) target = $region32
        $region31: #{tpu_custom_call.1} parent=27 // pred_region
          %174 = dma.done %s166, 256
        $region32: #{tpu_custom_call.1} parent=27 // pred_fallthru
          _
        %s175 = sand.u32 %s56, 1
        %s176 = scalar_lea.sflag [#allocation6], %s175
        %s177 = sand.u32 %s56, 1
        %s178 = smul.addr %s177, 16
        %s179 = scalar_lea.vmem [#allocation5], %s178
        // Predicated region
        $region33: #{tpu_custom_call.1} parent=27 // pred_check
          %p180 = pneg %p69
        $region34: #{tpu_custom_call.1} parent=27 // pred_check_branch
          %182 = sbr.rel (%p180) target = $region36
        $region35: #{tpu_custom_call.1} parent=27 // pred_region
          %184 = dma.done %s176, 256
        $region36: #{tpu_custom_call.1} parent=27 // pred_fallthru
          _
        %s185 = sand.u32 %s30, 1
        %s186 = scalar_lea.sflag [#allocation3], %s185
        %s187 = sand.u32 %s30, 1
        %s188 = smul.addr %s187, 16
        %s189 = scalar_lea.vmem [#allocation2], %s188
        %p190 = pneg %p43
        %p191 = pneg %p40
        %s192 = sand.u32 %s56, 1
        %s193 = scalar_lea.sflag [#allocation6], %s192
        %s194 = sand.u32 %s56, 1
        %s195 = smul.addr %s194, 16
        %s196 = scalar_lea.vmem [#allocation5], %s195
        %p197 = pneg %p69
        %p198 = pneg %p66
        %p199 = pneg %p95
        %p200 = pneg %p92
        %s201 = sand.u32 %s82, 1
        %s202 = scalar_lea.sflag [#allocation4], %s201
        %s203 = sand.u32 %s82, 1
        %s204 = smul.addr %s203, 4
        %s205 = scalar_lea.vmem [#allocation7], %s204
        %v207 = vld [vmem:[%s169] sm:$0xff]
        %v208 = vld [vmem:[%s169 + $0x8] sm:$0xff]
        %v209 = vpack.c.bf16 %v208, %v207
        %v210 = vld [vmem:[%s179] sm:$0xff]
        %v211 = vld [vmem:[%s179 + $0x8] sm:$0xff]
        %v212 = vpack.c.bf16 %v211, %v210
        %vm213 = vcmask 261120
        %v215 = vsel %vm213, %v212, 0
        %v218 = vsel %vm213, %v209, 0
        %220 = vmatpush.bf16.xpose.msra.mxu0 0
        %221 = vmatpush.bf16.xpose.msra.mxu0 0
        %222 = vmatpush.bf16.xpose.msra.mxu0 0
        %223 = vmatpush.bf16.xpose.msra.mxu0 0
        %224 = vmatpush.bf16.xpose.msra.mxu0 0
        %225 = vmatpush.bf16.xpose.msra.mxu0 0
        %226 = vmatpush.bf16.xpose.msra.mxu0 0
        %227 = vmatpush.bf16.xpose.msra.mxu0 %v218
        %228 = vmatmul.bf16.gmra.mxu0 %v215
        %v229 = vpop.f32.mrf.mxu0
        %v230 = vadd.f32 0.0, %v229
        %v231 = vpop.f32.mrf.mxu0
        %v232 = vadd.f32 0.0, %v231
        %233 = vdwg.mxu0
        %vm234 = vcmask 130048
        %v235 = vsel %vm234, %v230, -inf
        %v236 = vsel %vm234, %v232, -inf
        %v237 = vmax.f32 %v235, %v236
        %v238 = vrot.slane %v237, 4
        %v239 = vmax.f32 %v237, %v238
        %v240 = vrot.slane %v239, 2
        %v241 = vmax.f32 %v239, %v240
        %v242 = vrot.slane %v241, 1
        %v243 = vmax.f32 %v241, %v242
        %v244 = vsel %vm234, %v230, 0.0
        %v245 = vsel %vm234, %v232, 0.0
        %v246 = vadd.f32 %v244, %v245
        %v247 = vrot.slane %v246, 4
        %v248 = vadd.f32 %v246, %v247
        %v249 = vrot.slane %v248, 2
        %v250 = vadd.f32 %v248, %v249
        %v251 = vrot.slane %v250, 1
        %v252 = vadd.f32 %v250, %v251
        %v253 = vmul.f32 %v252, 0.0625
        %v254 = vsub.f32 %v243, %v253
        %256 = vrot.lane.b32.xlu0 %v212, 96
        %v257 = vpop.permute.xlu0 %256
        %259 = vrot.lane.b32.xlu0 %v209, 96
        %v260 = vpop.permute.xlu0 %259
        %v262 = vsel %vm213, %v257, 0
        %v265 = vsel %vm213, %v260, 0
        %267 = vmatpush.bf16.xpose.msra.mxu0 0
        %268 = vmatpush.bf16.xpose.msra.mxu0 0
        %269 = vmatpush.bf16.xpose.msra.mxu0 0
        %270 = vmatpush.bf16.xpose.msra.mxu0 0
        %271 = vmatpush.bf16.xpose.msra.mxu0 0
        %272 = vmatpush.bf16.xpose.msra.mxu0 0
        %273 = vmatpush.bf16.xpose.msra.mxu0 0
        %274 = vmatpush.bf16.xpose.msra.mxu0 %v265
        %275 = vmatmul.bf16.gmra.mxu0 %v262
        %v276 = vpop.f32.mrf.mxu0
        %v277 = vadd.f32 0.0, %v276
        %v278 = vpop.f32.mrf.mxu0
        %v279 = vadd.f32 0.0, %v278
        %280 = vdwg.mxu0
        %v281 = vsel %vm234, %v277, -inf
        %v282 = vsel %vm234, %v279, -inf
        %v283 = vmax.f32 %v281, %v282
        %v284 = vrot.slane %v283, 4
        %v285 = vmax.f32 %v283, %v284
        %v286 = vrot.slane %v285, 2
        %v287 = vmax.f32 %v285, %v286
        %v288 = vrot.slane %v287, 1
        %v289 = vmax.f32 %v287, %v288
        %v290 = vsel %vm234, %v277, 0.0
        %v291 = vsel %vm234, %v279, 0.0
        %v292 = vadd.f32 %v290, %v291
        %v293 = vrot.slane %v292, 4
        %v294 = vadd.f32 %v292, %v293
        %v295 = vrot.slane %v294, 2
        %v296 = vadd.f32 %v294, %v295
        %v297 = vrot.slane %v296, 1
        %v298 = vadd.f32 %v296, %v297
        %v299 = vmul.f32 %v298, 0.0625
        %v300 = vsub.f32 %v289, %v299
        %301 = vrot.lane.b32.xlu0 %v212, 64
        %v302 = vpop.permute.xlu0 %301
        %303 = vrot.lane.b32.xlu0 %v209, 64
        %v304 = vpop.permute.xlu0 %303
        %v306 = vsel %vm213, %v302, 0
        %v309 = vsel %vm213, %v304, 0
        %311 = vmatpush.bf16.xpose.msra.mxu0 0
        %312 = vmatpush.bf16.xpose.msra.mxu0 0
        %313 = vmatpush.bf16.xpose.msra.mxu0 0
        %314 = vmatpush.bf16.xpose.msra.mxu0 0
        %315 = vmatpush.bf16.xpose.msra.mxu0 0
        %316 = vmatpush.bf16.xpose.msra.mxu0 0
        %317 = vmatpush.bf16.xpose.msra.mxu0 0
        %318 = vmatpush.bf16.xpose.msra.mxu0 %v309
        %319 = vmatmul.bf16.gmra.mxu0 %v306
        %v320 = vpop.f32.mrf.mxu0
        %v321 = vadd.f32 0.0, %v320
        %v322 = vpop.f32.mrf.mxu0
        %v323 = vadd.f32 0.0, %v322
        %324 = vdwg.mxu0
        %v325 = vsel %vm234, %v321, -inf
        %v326 = vsel %vm234, %v323, -inf
        %v327 = vmax.f32 %v325, %v326
        %v328 = vrot.slane %v327, 4
        %v329 = vmax.f32 %v327, %v328
        %v330 = vrot.slane %v329, 2
        %v331 = vmax.f32 %v329, %v330
        %v332 = vrot.slane %v331, 1
        %v333 = vmax.f32 %v331, %v332
        %v334 = vsel %vm234, %v321, 0.0
        %v335 = vsel %vm234, %v323, 0.0
        %v336 = vadd.f32 %v334, %v335
        %v337 = vrot.slane %v336, 4
        %v338 = vadd.f32 %v336, %v337
        %v339 = vrot.slane %v338, 2
        %v340 = vadd.f32 %v338, %v339
        %v341 = vrot.slane %v340, 1
        %v342 = vadd.f32 %v340, %v341
        %v343 = vmul.f32 %v342, 0.0625
        %v344 = vsub.f32 %v333, %v343
        %345 = vrot.lane.b32.xlu0 %v212, 32
        %v346 = vpop.permute.xlu0 %345
        %347 = vrot.lane.b32.xlu0 %v209, 32
        %v348 = vpop.permute.xlu0 %347
        %v350 = vsel %vm213, %v346, 0
        %v353 = vsel %vm213, %v348, 0
        %355 = vmatpush.bf16.xpose.msra.mxu0 0
        %356 = vmatpush.bf16.xpose.msra.mxu0 0
        %357 = vmatpush.bf16.xpose.msra.mxu0 0
        %358 = vmatpush.bf16.xpose.msra.mxu0 0
        %359 = vmatpush.bf16.xpose.msra.mxu0 0
        %360 = vmatpush.bf16.xpose.msra.mxu0 0
        %361 = vmatpush.bf16.xpose.msra.mxu0 0
        %362 = vmatpush.bf16.xpose.msra.mxu0 %v353
        %363 = vmatmul.bf16.gmra.mxu0 %v350
        %v364 = vpop.f32.mrf.mxu0
        %v365 = vadd.f32 0.0, %v364
        %v366 = vpop.f32.mrf.mxu0
        %v367 = vadd.f32 0.0, %v366
        %368 = vdwg.mxu0
        %v369 = vsel %vm234, %v365, -inf
        %v370 = vsel %vm234, %v367, -inf
        %v371 = vmax.f32 %v369, %v370
        %v372 = vrot.slane %v371, 4
        %v373 = vmax.f32 %v371, %v372
        %v374 = vrot.slane %v373, 2
        %v375 = vmax.f32 %v373, %v374
        %v376 = vrot.slane %v375, 1
        %v377 = vmax.f32 %v375, %v376
        %v378 = vsel %vm234, %v365, 0.0
        %v379 = vsel %vm234, %v367, 0.0
        %v380 = vadd.f32 %v378, %v379
        %v381 = vrot.slane %v380, 4
        %v382 = vadd.f32 %v380, %v381
        %v383 = vrot.slane %v382, 2
        %v384 = vadd.f32 %v382, %v383
        %v385 = vrot.slane %v384, 1
        %v386 = vadd.f32 %v384, %v385
        %v387 = vmul.f32 %v386, 0.0625
        %v388 = vsub.f32 %v377, %v387
        %vm389 = vcmask 1040384
        %v390 = vsel %vm389, %v254, %v300
        %vm391 = vcmask 1041408
        %v392 = vsel %vm391, %v390, %v344
        %vm393 = vcmask 1042432
        %v394 = vsel %vm393, %v392, %v388
        %vm395 = vcmask 125952
        %396 = vst.msk [vmem:[%s205] sm:$0xf] %vm395, %v394
        %s397 = sand.u32 %s82, 1
        %s398 = scalar_lea.sflag [#allocation4], %s397
        %s399 = sand.u32 %s82, 1
        %s400 = smul.addr %s399, 4
        %s401 = scalar_lea.vmem [#allocation7], %s400
        // Predicated region
        $region37: #{tpu_custom_call.1} parent=27 // pred_check
          %p402 = pneg %p92
        $region38: #{tpu_custom_call.1} parent=27 // pred_check_branch
          %404 = sbr.rel (%p402) target = $region40
        $region39: #{tpu_custom_call.1} parent=27 // pred_region
          %406 = vsyncadd %s398, 0
          %s407 = smul.addr %s22, 4
          %s408 = scalar_lea.hbm %s2, %s407
          %s410 = sshll.u32 %s401, 4
          %s411 = int_to_ptr.vmem [resolvable:$true] %s410
          %s412 = sshll.u32 %s408, 4
          %s413 = int_to_ptr.hbm [resolvable:$true] %s412
          %415 = dma.vmem_to_hbm [thread:$0]  %s411, 64, %s413, %s398
        $region40: #{tpu_custom_call.1} parent=27 // pred_fallthru
          _
      $region28: #{tpu_custom_call.1} parent=5 // pred_fallthru
        _
      %p416 = scmp.le.s32.totalorder 2, %s17
      // Predicated region
      $region41: #{tpu_custom_call.1} parent=5 // pred_check
        %p417 = pneg %p416
      $region42: #{tpu_custom_call.1} parent=5 // pred_check_branch
        %419 = sbr.rel (%p417) target = $region44
      $region43: #{tpu_custom_call.1} parent=5 // pred_region
        %s420 = ssub.s32 %s17, 2
        // Predicated region
        $region45: #{tpu_custom_call.1} parent=43 // pred_check
          %p421 = pneg %p98
        $region46: #{tpu_custom_call.1} parent=43 // pred_check_branch
          %423 = sbr.rel (%p421) target = $region48
        $region47: #{tpu_custom_call.1} parent=43 // pred_region
          %s424 = sand.u32 %s83, 1
          %s425 = scalar_lea.sflag [#allocation4], %s424
          %s426 = sand.u32 %s83, 1
          %s427 = smul.addr %s426, 4
          %s428 = scalar_lea.vmem [#allocation7], %s427
          %430 = dma.done %s425, 64
        $region48: #{tpu_custom_call.1} parent=43 // pred_fallthru
          _
      $region44: #{tpu_custom_call.1} parent=5 // pred_fallthru
        _
    $region6: #{tpu_custom_call.1} parent=1 // loop_footer
      %s21 = sadd.s32 1, %s17
    $region7: #{tpu_custom_call.1} parent=1 // loop_footer_branch
      %16 = sbr.rel target = $region3
    $region8: #{tpu_custom_call.1} parent=1 // loop_exit
      _
    %431 = vsyncpa [#allocation3], 1
    %s432 = scalar_lea.sflag [#allocation3], 1
    %433 = vsyncpa %s432, 1
    %434 = vsyncpa [#allocation6], 1
    %s435 = scalar_lea.sflag [#allocation6], 1
    %436 = vsyncpa %s435, 1
    %437 = vsyncpa [#allocation4], 1
    %s438 = scalar_lea.sflag [#allocation4], 1
    %439 = vsyncpa %s438, 1

</llo_original>
